<compile_context>
chip_gen: v6e
topology: v6e:2x2x1
jax: 0.10.0
libtpu: 0.0.40
codegen_flags: <defaults>
</compile_context>

<pallas_src>
import jax
import jax.numpy as jnp
from jax.experimental import pallas as pl
from jax.experimental.pallas import tpu as pltpu


# ------------------------- fixed module structure ---------------------------
# Track -> number of EncMod stages.  Output order matches CondSkip.forward:
#   skipA <- EncoderSubTrackD (4 stages), skipB <- C (3), skipC <- B (2),
#   skipD <- A (1).  Stage i: cin = 1 if i==0 else 2**(i+1), cout = 2**(i+2).
TRACK_ORDER = ("D", "C", "B", "A")
TRACK_STAGES = {"D": 4, "C": 3, "B": 2, "A": 1}

# Merged (block-diagonal) per-stage weight shapes: (rows, cols).
STAGE_DIMS = ((16, 1), (24, 16), (32, 24), (32, 32))
SLAB_SHAPE = (32, 128)          # single packed parameter slab
OUT_ROWS = 64                   # fused output slab rows (60 used, 64 aligned)

_MIN_SPLIT_LANES = 4096         # only split the grid when each half >= this
_MAX_BLOCK_LANES = 32768        # per-block lane cap (VMEM-safe on v7x too)


def _build_meta():
    """(rows, wdim, w_col, b_col) per merged stage inside the param slab."""
    meta = []
    col = 0
    for h, w in STAGE_DIMS:
        meta.append((h, w, col, col + w))
        col += w + 1
    assert col <= SLAB_SHAPE[1]
    return tuple(meta)


META = _build_meta()


# ----------------------------- fused kernel --------------------------------

def _make_cond_skip_kernel(meta):
    h0, _, wc0, bc0 = meta[0]

    def kernel(p_ref, x_ref, o_ref):
        p = p_ref[...]                            # (32, 128) f32 param slab
        x = x_ref[...]                            # (1, tp) f32, pixels on lanes

        # Stage 0 (Cin = 1, all four tracks stacked): VPU broadcast multiply,
        # kept in f32 (v5e VPU/EUP have no bf16 path).
        w0 = p[0:h0, wc0:wc0 + 1]                 # (16, 1)
        b0 = p[0:h0, bc0:bc0 + 1]                 # (16, 1)
        y = jnp.maximum(w0 * x + b0, 0.0)         # (16, tp)
        ys = [y]

        # Stages 1..3: block-diagonal merged weights on the MXU, bf16 inputs
        # with f32 accumulation; bias + ReLU in f32 on the VPU.
        for h, wdim, wc, bc in meta[1:]:
            w_bf = p[0:h, wc:wc + wdim].astype(jnp.bfloat16)   # (h, wdim)
            bias = p[0:h, bc:bc + 1]                           # (h, 1)
            y = jnp.dot(w_bf, y.astype(jnp.bfloat16),
                        preferred_element_type=jnp.float32)    # (h, tp)
            y = jnp.maximum(y + bias, 0.0)
            ys.append(y)

        y0, y1, y2, y3 = ys
        # Single fused output slab (all pieces are multiples of 8 sublanes):
        #   rows  0:32  -> track D final (skipA)
        #   rows 32:48  -> track C final (skipB)     = y2[16:32]
        #   rows 48:56  -> track B final (skipC)     = y1[16:24]
        #   rows 56:64  -> y0[8:16]; track A (skipD) = rows 60:64
        slab = jnp.concatenate([y3, y2[16:32], y1[16:24], y0[8:16]], axis=0)
        o_ref[...] = slab.astype(o_ref.dtype)     # one unmasked (64, tp) store

    return kernel


def _pick_tile(P):
    """Lane tile over pixels. grid=(1,) at small P; split only when big."""
    assert P % 128 == 0
    tp = P
    # Split into two "parallel" blocks only when each half amortizes the
    # ~0.35us per-step cost: only v7x (2 TCs) benefits from the split, and
    # single-TC v5e/v6e are not penalized at small P.
    if P % 256 == 0 and P // 2 >= _MIN_SPLIT_LANES:
        tp = P // 2
    # Cap per-block lanes so the double-buffered output slab stays well under
    # VMEM on every generation (v7x: 64 MiB physical per TC).
    while tp > _MAX_BLOCK_LANES and tp % 256 == 0:
        tp //= 2
    return tp


def cond_skip_pallas(param_slab, x_row):
    """param_slab: (32,128) f32.  x_row: (1, P).  Returns (64, P) output slab."""
    P = x_row.shape[1]
    tp = _pick_tile(P)
    grid = (P // tp,)

    return pl.pallas_call(
        _make_cond_skip_kernel(META),
        out_shape=jax.ShapeDtypeStruct((OUT_ROWS, P), x_row.dtype),
        grid_spec=pltpu.PrefetchScalarGridSpec(
            num_scalar_prefetch=0,
            grid=grid,
            in_specs=[
                pl.BlockSpec(SLAB_SHAPE, lambda i: (0, 0)),   # all params, 1 DMA
                pl.BlockSpec((1, tp), lambda i: (0, i)),      # input pixels
            ],
            out_specs=pl.BlockSpec((OUT_ROWS, tp), lambda i: (0, i)),
        ),
        compiler_params=pltpu.CompilerParams(
            dimension_semantics=("parallel",),
            vmem_limit_bytes=48 * 1024 * 1024,
        ),
    )(param_slab, x_row)


# ----------------------------- parameters ----------------------------------

def make_encmod_params(key, cin, cout):
    kw, kg, kb = jax.random.split(key, 3)
    w = jax.random.normal(kw, (cin, cout), jnp.float32) / jnp.sqrt(float(cin))
    gamma = 1.0 + 0.1 * jax.random.normal(kg, (cout,), jnp.float32)
    beta = 0.1 * jax.random.normal(kb, (cout,), jnp.float32)
    running_mean = jnp.zeros((cout,), jnp.float32)
    running_var = jnp.ones((cout,), jnp.float32)
    eps = 1e-5
    scale = gamma / jnp.sqrt(running_var + eps)
    bias = beta - running_mean * scale
    # Fold BN scale into the conv weight; (cout, cin) for pixels-on-lanes.
    wT = jnp.transpose(w * scale[None, :])
    return {"wT": wT, "bias": bias.reshape(cout, 1)}


def make_track_params(key, num_stages):
    keys = jax.random.split(key, num_stages)
    params = []
    for i in range(num_stages):
        cin = 1 if i == 0 else 2 ** (i + 1)
        cout = 2 ** (i + 2)
        params.append(make_encmod_params(keys[i], cin, cout))
    return params


def build_merged_params(params_all):
    """Build the 4 block-diagonal merged stages from per-track EncMod params."""
    pD, pC, pB, pA = (params_all[t] for t in TRACK_ORDER)
    # Stage 0: all four tracks stacked (rows: D 0:4, C 4:8, B 8:12, A 12:16).
    W0 = jnp.concatenate([pD[0]["wT"], pC[0]["wT"], pB[0]["wT"], pA[0]["wT"]], axis=0)
    b0 = jnp.concatenate([pD[0]["bias"], pC[0]["bias"], pB[0]["bias"], pA[0]["bias"]], axis=0)
    # Stage 1: tracks D, C, B (input = 16-row stage-0 output; A's cols zero).
    W1 = jnp.zeros((24, 16), jnp.float32)
    W1 = (W1.at[0:8, 0:4].set(pD[1]["wT"])
             .at[8:16, 4:8].set(pC[1]["wT"])
             .at[16:24, 8:12].set(pB[1]["wT"]))
    b1 = jnp.concatenate([pD[1]["bias"], pC[1]["bias"], pB[1]["bias"]], axis=0)
    # Stage 2: tracks D, C (input = 24-row stage-1 output; B's cols zero).
    W2 = jnp.zeros((32, 24), jnp.float32)
    W2 = W2.at[0:16, 0:8].set(pD[2]["wT"]).at[16:32, 8:16].set(pC[2]["wT"])
    b2 = jnp.concatenate([pD[2]["bias"], pC[2]["bias"]], axis=0)
    # Stage 3: track D only (input = 32-row stage-2 output; C's cols zero).
    W3 = jnp.zeros((32, 32), jnp.float32)
    W3 = W3.at[0:32, 0:16].set(pD[3]["wT"])
    b3 = pD[3]["bias"]
    return [(W0, b0), (W1, b1), (W2, b2), (W3, b3)]


def pack_param_slab(merged):
    """Pack all merged weights + biases into one (32, 128) f32 slab."""
    slab = jnp.zeros(SLAB_SHAPE, jnp.float32)
    for (W, b), (h, wdim, wcol, bcol) in zip(merged, META):
        assert W.shape == (h, wdim) and b.shape == (h, 1)
        slab = slab.at[:h, wcol:wcol + wdim].set(W)
        slab = slab.at[:h, bcol:bcol + 1].set(b)
    return slab


# ------------------------------ forward -------------------------------------

def _round_up(n, m):
    return ((n + m - 1) // m) * m


@jax.jit
def cond_skip_forward(param_slab, a, b):
    """a, b: NCHW (B, 1, H, W).  Returns (skipA, skipB, skipC, skipD) in NCHW."""
    B, C, H, W = a.shape
    assert C == 1, "CondSkip expects single-channel inputs"
    x = jnp.concatenate([a, b], axis=0)                 # (2B, 1, H, W)
    N = 2 * B
    P0 = N * H * W
    x_row = x.reshape(1, P0)                            # pixels on lanes
    P = _round_up(P0, 512)
    if P != P0:                                         # pad instead of assert
        x_row = jnp.pad(x_row, ((0, 0), (0, P - P0)))

    out = cond_skip_pallas(param_slab, x_row)           # (64, P)
    out = out[:, :P0]

    def unpack(lo, hi):
        c = hi - lo
        # NCHW to match the PyTorch module; if downstream can consume
        # channel-major (C, N, H, W), this transpose (an HBM pass) can be
        # dropped entirely.
        return out[lo:hi].reshape(c, N, H, W).transpose(1, 0, 2, 3)

    skipA = unpack(0, 32)      # track D, 32 ch
    skipB = unpack(32, 48)     # track C, 16 ch
    skipC = unpack(48, 56)     # track B,  8 ch
    skipD = unpack(60, 64)     # track A,  4 ch
    return skipA, skipB, skipC, skipD


# --------------------------- pure-JAX reference ------------------------------

def cond_skip_reference(params_all, a, b):
    """f32 reference (same folded eval-mode BN) for numeric validation."""
    x = jnp.concatenate([a, b], axis=0)

    def run_track(params):
        y = x
        for p in params:
            y = jnp.einsum("oc,nchw->nohw", p["wT"], y) + p["bias"].reshape(1, -1, 1, 1)
            y = jnp.maximum(y, 0.0)
        return y

    return tuple(run_track(params_all[t]) for t in TRACK_ORDER)


if __name__ == "__main__":
    key = jax.random.PRNGKey(0)
    ka, kb, kD, kC, kBt, kA = jax.random.split(key, 6)

    B, H, W = 2, 16, 16
    a = jax.random.normal(ka, (B, 1, H, W), jnp.float32)
    b = jax.random.normal(kb, (B, 1, H, W), jnp.float32)

    params_all = {
        "D": make_track_params(kD, TRACK_STAGES["D"]),   # 1 -> 4 -> 8 -> 16 -> 32
        "C": make_track_params(kC, TRACK_STAGES["C"]),   # 1 -> 4 -> 8 -> 16
        "B": make_track_params(kBt, TRACK_STAGES["B"]),  # 1 -> 4 -> 8
        "A": make_track_params(kA, TRACK_STAGES["A"]),   # 1 -> 4
    }
    param_slab = pack_param_slab(build_merged_params(params_all))

    outs = jax.block_until_ready(cond_skip_forward(param_slab, a, b))
    skipA, skipB, skipC, skipD = outs

    assert skipA.shape == (2 * B, 32, H, W), skipA.shape
    assert skipB.shape == (2 * B, 16, H, W), skipB.shape
    assert skipC.shape == (2 * B, 8, H, W), skipC.shape
    assert skipD.shape == (2 * B, 4, H, W), skipD.shape
    assert jnp.all(skipA >= 0) and jnp.all(skipD >= 0)   # ReLU sanity

    # Validate the fused block-diagonal kernel against the f32 reference
    # (tolerance accounts for bf16 MXU dot inputs).
    refs = cond_skip_reference(params_all, a, b)
    for got, want in zip(outs, refs):
        err = float(jnp.max(jnp.abs(got - want)))
        tol = 0.05 * (float(jnp.max(jnp.abs(want))) + 1.0)
        assert err <= tol, (err, tol)

    print("KERNEL_OK")
</pallas_src>

<mosaic_0001>
module attributes {stable_mosaic.version = 11 : i64} {
  func.func @kernel(%arg0: i32, %arg1: memref<32x128xf32, #tpu.memory_space<vmem>>, %arg2: memref<1x1024xf32, #tpu.memory_space<vmem>>, %arg3: memref<64x1024xf32, #tpu.memory_space<vmem>>) attributes {dimension_semantics = [#tpu.dimension_semantics<parallel>], iteration_bounds = array<i64: 1>, scalar_prefetch = 0 : i64, scratch_operands = 0 : i64, tpu.core_type = #tpu.core_type<tc>, window_params = [{pipeline_mode = #tpu.pipeline_mode<synchronous>, transform_indices = @transform_0, window_bounds = array<i64: 32, 128>}, {transform_indices = @transform_1, window_bounds = array<i64: 1, 1024>}, {transform_indices = @transform_2, window_bounds = array<i64: 64, 1024>}]} {
    %c0 = arith.constant 0 : index
    %c0_0 = arith.constant 0 : index
    %0 = vector.load %arg1[%c0, %c0_0] : memref<32x128xf32, #tpu.memory_space<vmem>>, vector<32x128xf32>
    %c0_1 = arith.constant 0 : index
    %c0_2 = arith.constant 0 : index
    %1 = vector.load %arg2[%c0_1, %c0_2] : memref<1x1024xf32, #tpu.memory_space<vmem>>, vector<1x1024xf32>
    %2 = vector.extract_strided_slice %0 {offsets = [0, 0], sizes = [16, 1], strides = [1, 1]} : vector<32x128xf32> to vector<16x1xf32>
    %3 = vector.extract_strided_slice %0 {offsets = [0, 1], sizes = [16, 1], strides = [1, 1]} : vector<32x128xf32> to vector<16x1xf32>
    %4 = vector.broadcast %2 : vector<16x1xf32> to vector<16x1024xf32>
    %5 = vector.broadcast %1 : vector<1x1024xf32> to vector<16x1024xf32>
    %6 = arith.mulf %4, %5 : vector<16x1024xf32>
    %7 = vector.broadcast %3 : vector<16x1xf32> to vector<16x1024xf32>
    %8 = arith.addf %6, %7 : vector<16x1024xf32>
    %cst = arith.constant 0.000000e+00 : f32
    %9 = vector.broadcast %cst : f32 to vector<16x1024xf32>
    %10 = arith.maximumf %8, %9 : vector<16x1024xf32>
    %11 = vector.extract_strided_slice %0 {offsets = [0, 2], sizes = [24, 16], strides = [1, 1]} : vector<32x128xf32> to vector<24x16xf32>
    %12 = arith.truncf %11 : vector<24x16xf32> to vector<24x16xbf16>
    %13 = vector.extract_strided_slice %0 {offsets = [0, 18], sizes = [24, 1], strides = [1, 1]} : vector<32x128xf32> to vector<24x1xf32>
    %14 = arith.truncf %10 : vector<16x1024xf32> to vector<16x1024xbf16>
    %cst_3 = arith.constant dense<0.000000e+00> : vector<24x1024xf32>
    %15 = tpu.matmul %12, %14, %cst_3 {dimension_numbers = #tpu.dot_dimension_numbers<[1], [0], [0], [1], [0, 0, 1, 1], [], []>} : vector<24x16xbf16>, vector<16x1024xbf16>, vector<24x1024xf32> -> vector<24x1024xf32>
    %16 = vector.broadcast %13 : vector<24x1xf32> to vector<24x1024xf32>
    %17 = arith.addf %15, %16 : vector<24x1024xf32>
    %cst_4 = arith.constant 0.000000e+00 : f32
    %18 = vector.broadcast %cst_4 : f32 to vector<24x1024xf32>
    %19 = arith.maximumf %17, %18 : vector<24x1024xf32>
    %20 = vector.extract_strided_slice %0 {offsets = [0, 19], sizes = [32, 24], strides = [1, 1]} : vector<32x128xf32> to vector<32x24xf32>
    %21 = arith.truncf %20 : vector<32x24xf32> to vector<32x24xbf16>
    %22 = vector.extract_strided_slice %0 {offsets = [0, 43], sizes = [32, 1], strides = [1, 1]} : vector<32x128xf32> to vector<32x1xf32>
    %23 = arith.truncf %19 : vector<24x1024xf32> to vector<24x1024xbf16>
    %cst_5 = arith.constant dense<0.000000e+00> : vector<32x1024xf32>
    %24 = tpu.matmul %21, %23, %cst_5 {dimension_numbers = #tpu.dot_dimension_numbers<[1], [0], [0], [1], [0, 0, 1, 1], [], []>} : vector<32x24xbf16>, vector<24x1024xbf16>, vector<32x1024xf32> -> vector<32x1024xf32>
    %25 = vector.broadcast %22 : vector<32x1xf32> to vector<32x1024xf32>
    %26 = arith.addf %24, %25 : vector<32x1024xf32>
    %cst_6 = arith.constant 0.000000e+00 : f32
    %27 = vector.broadcast %cst_6 : f32 to vector<32x1024xf32>
    %28 = arith.maximumf %26, %27 : vector<32x1024xf32>
    %29 = vector.extract_strided_slice %0 {offsets = [0, 44], sizes = [32, 32], strides = [1, 1]} : vector<32x128xf32> to vector<32x32xf32>
    %30 = arith.truncf %29 : vector<32x32xf32> to vector<32x32xbf16>
    %31 = vector.extract_strided_slice %0 {offsets = [0, 76], sizes = [32, 1], strides = [1, 1]} : vector<32x128xf32> to vector<32x1xf32>
    %32 = arith.truncf %28 : vector<32x1024xf32> to vector<32x1024xbf16>
    %cst_7 = arith.constant dense<0.000000e+00> : vector<32x1024xf32>
    %33 = tpu.matmul %30, %32, %cst_7 {dimension_numbers = #tpu.dot_dimension_numbers<[1], [0], [0], [1], [0, 0, 1, 1], [], []>} : vector<32x32xbf16>, vector<32x1024xbf16>, vector<32x1024xf32> -> vector<32x1024xf32>
    %34 = vector.broadcast %31 : vector<32x1xf32> to vector<32x1024xf32>
    %35 = arith.addf %33, %34 : vector<32x1024xf32>
    %cst_8 = arith.constant 0.000000e+00 : f32
    %36 = vector.broadcast %cst_8 : f32 to vector<32x1024xf32>
    %37 = arith.maximumf %35, %36 : vector<32x1024xf32>
    %38 = vector.extract_strided_slice %28 {offsets = [16, 0], sizes = [16, 1024], strides = [1, 1]} : vector<32x1024xf32> to vector<16x1024xf32>
    %39 = vector.extract_strided_slice %19 {offsets = [16, 0], sizes = [8, 1024], strides = [1, 1]} : vector<24x1024xf32> to vector<8x1024xf32>
    %40 = vector.extract_strided_slice %10 {offsets = [8, 0], sizes = [8, 1024], strides = [1, 1]} : vector<16x1024xf32> to vector<8x1024xf32>
    %41 = tpu.concatenate %37, %38, %39, %40 in 0 : vector<32x1024xf32>, vector<16x1024xf32>, vector<8x1024xf32>, vector<8x1024xf32> -> vector<64x1024xf32>
    %c0_9 = arith.constant 0 : index
    %c0_10 = arith.constant 0 : index
    %42 = vector.load %arg3[%c0_9, %c0_10] : memref<64x1024xf32, #tpu.memory_space<vmem>>, vector<64x1024xf32>
    tpu.vector_store %arg3[%c0_9, %c0_10], %41 {strides = array<i32>} : memref<64x1024xf32, #tpu.memory_space<vmem>>, vector<64x1024xf32>,
    return
  }
  func.func @transform_0(%arg0: i32) -> (i32, i32) {
    %c0_i32 = arith.constant 0 : i32
    %c0_i32_0 = arith.constant 0 : i32
    %c0_i32_1 = arith.constant 0 : i32
    return %c0_i32, %c0_i32_0 : i32, i32
  }
  func.func @transform_1(%arg0: i32) -> (i32, i32) {
    %c0_i32 = arith.constant 0 : i32
    %c0_i32_0 = arith.constant 0 : i32
    return %c0_i32, %arg0 : i32, i32
  }
  func.func @transform_2(%arg0: i32) -> (i32, i32) {
    %c0_i32 = arith.constant 0 : i32
    %c0_i32_0 = arith.constant 0 : i32
    return %c0_i32, %arg0 : i32, i32
  }
}

</mosaic_0001>

<llo_original>
// kernel: cond_skip_forward.1
$region0: #{cond_skip_forward.1}
  #allocation0 [shape = 'u32[]', space=smem, size = 0x4, offset = 0x4, fixed_abs, tag = 'smem constant byte address 0x4 - core index']
  #allocation1 [shape = 'u32[144,128]{1,0:T(1,128)}', space=vmem, size = 0x12000, scoped, tag = 'internal scratch']
  %s0 = inlined_call_operand.vmem [shape: f32[32,128], index: 0, kind: input, shape index: {}]
  %s1 = inlined_call_operand.vmem [shape: f32[1,1024], index: 1, kind: input, shape index: {}]
  %s2 = inlined_call_operand.vmem [shape: f32[64,1024], index: 2, kind: output, shape index: {}]
  %s3 = sld [smem:[#allocation0]]
  $region18: #{cond_skip_forward.1} parent=0
    _
  %s5 = ssub.s32 1, %s3
  %s6 = scalar_select 0, %s5, %s3
  // Predicated region
  $region2: #{cond_skip_forward.1} parent=0 // pred_check
    _
  $region3: #{cond_skip_forward.1} parent=0 // pred_check_branch
    %8 = sbr.rel (0) target = $region5
  $region4: #{cond_skip_forward.1} parent=0 // pred_region
    _
  $region5: #{cond_skip_forward.1} parent=0 // pred_fallthru
    _
  // Predicated region
  $region6: #{cond_skip_forward.1} parent=0 // pred_check
    _
  $region7: #{cond_skip_forward.1} parent=0 // pred_check_branch
    %10 = sbr.rel (0) target = $region9
  $region8: #{cond_skip_forward.1} parent=0 // pred_region
    _
  $region9: #{cond_skip_forward.1} parent=0 // pred_fallthru
    _
  %v12 = vld [vmem:[%s0] sm:$0xff]
  %v13 = vld [vmem:[%s0 + $0x8] sm:$0xff]
  %v14 = vld [vmem:[%s0 + $0x10] sm:$0xff]
  %v15 = vld [vmem:[%s0 + $0x18] sm:$0xff]
  %v16 = vld [vmem:[%s1] sm:$0xff]
  %18 = vset.pattern.permute.xlu0 0
  %19 = vperm.xlu0 %18, %v12
  %v20 = vpop.permute.xlu0 %19
  %23 = vset.pattern.permute.xlu0 0
  %24 = vperm.xlu0 %23, %v13
  %v25 = vpop.permute.xlu0 %24
  %v28 = vlaneseq
  %v29 = vshrl.u32 %v28, 7
  %v30 = vsub.s32 0, %v29
  %v31 = vrot.slane %v16, %v30
  %v32 = vlaneseq
  %v33 = vshrl.u32 %v32, 7
  %v34 = vsub.s32 1, %v33
  %v35 = vrot.slane %v16, %v34
  %v36 = vlaneseq
  %v37 = vshrl.u32 %v36, 7
  %v38 = vsub.s32 2, %v37
  %v39 = vrot.slane %v16, %v38
  %v40 = vlaneseq
  %v41 = vshrl.u32 %v40, 7
  %v42 = vsub.s32 3, %v41
  %v43 = vrot.slane %v16, %v42
  %v44 = vlaneseq
  %v45 = vshrl.u32 %v44, 7
  %v46 = vsub.s32 4, %v45
  %v47 = vrot.slane %v16, %v46
  %v48 = vlaneseq
  %v49 = vshrl.u32 %v48, 7
  %v50 = vsub.s32 5, %v49
  %v51 = vrot.slane %v16, %v50
  %v52 = vlaneseq
  %v53 = vshrl.u32 %v52, 7
  %v54 = vsub.s32 6, %v53
  %v55 = vrot.slane %v16, %v54
  %v56 = vlaneseq
  %v57 = vshrl.u32 %v56, 7
  %v58 = vsub.s32 7, %v57
  %v59 = vrot.slane %v16, %v58
  %v68 = vmul.f32 %v20, %v31
  %v69 = vmul.f32 %v20, %v35
  %v70 = vmul.f32 %v20, %v39
  %v71 = vmul.f32 %v20, %v43
  %v72 = vmul.f32 %v20, %v47
  %v73 = vmul.f32 %v20, %v51
  %v74 = vmul.f32 %v20, %v55
  %v75 = vmul.f32 %v20, %v59
  %v76 = vmul.f32 %v25, %v31
  %v77 = vmul.f32 %v25, %v35
  %v78 = vmul.f32 %v25, %v39
  %v79 = vmul.f32 %v25, %v43
  %v80 = vmul.f32 %v25, %v47
  %v81 = vmul.f32 %v25, %v51
  %v82 = vmul.f32 %v25, %v55
  %v83 = vmul.f32 %v25, %v59
  %84 = vset.pattern.permute.xlu0 1
  %85 = vperm.xlu0 %84, %v12
  %v86 = vpop.permute.xlu0 %85
  %88 = vset.pattern.permute.xlu0 1
  %89 = vperm.xlu0 %88, %v13
  %v90 = vpop.permute.xlu0 %89
  %v92 = vadd.f32 %v68, %v86
  %v93 = vadd.f32 %v69, %v86
  %v94 = vadd.f32 %v70, %v86
  %v95 = vadd.f32 %v71, %v86
  %v96 = vadd.f32 %v72, %v86
  %v97 = vadd.f32 %v73, %v86
  %v98 = vadd.f32 %v74, %v86
  %v99 = vadd.f32 %v75, %v86
  %v100 = vadd.f32 %v76, %v90
  %v101 = vadd.f32 %v77, %v90
  %v102 = vadd.f32 %v78, %v90
  %v103 = vadd.f32 %v79, %v90
  %v104 = vadd.f32 %v80, %v90
  %v105 = vadd.f32 %v81, %v90
  %v106 = vadd.f32 %v82, %v90
  %v107 = vadd.f32 %v83, %v90
  %v108 = vmax.f32 %v92, 0.0
  %v109 = vmax.f32 %v93, 0.0
  %v110 = vmax.f32 %v94, 0.0
  %v111 = vmax.f32 %v95, 0.0
  %v112 = vmax.f32 %v96, 0.0
  %v113 = vmax.f32 %v97, 0.0
  %v114 = vmax.f32 %v98, 0.0
  %v115 = vmax.f32 %v99, 0.0
  %v116 = vmax.f32 %v100, 0.0
  %v117 = vmax.f32 %v101, 0.0
  %v118 = vmax.f32 %v102, 0.0
  %v119 = vmax.f32 %v103, 0.0
  %v120 = vmax.f32 %v104, 0.0
  %v121 = vmax.f32 %v105, 0.0
  %v122 = vmax.f32 %v106, 0.0
  %v123 = vmax.f32 %v107, 0.0
  %v124 = vpack.c.bf16 %v13, %v12
  %v125 = vpack.c.bf16 %v14, %v14
  %v126 = vpack.c.bf16 %v116, %v108
  %v127 = vpack.c.bf16 %v117, %v109
  %v128 = vpack.c.bf16 %v118, %v110
  %v129 = vpack.c.bf16 %v119, %v111
  %v130 = vpack.c.bf16 %v120, %v112
  %v131 = vpack.c.bf16 %v121, %v113
  %v132 = vpack.c.bf16 %v122, %v114
  %v133 = vpack.c.bf16 %v123, %v115
  %134 = vset.pattern.permute.xlu0 18
  %135 = vperm.xlu0 %134, %v12
  %v136 = vpop.permute.xlu0 %135
  %138 = vset.pattern.permute.xlu0 18
  %139 = vperm.xlu0 %138, %v13
  %v140 = vpop.permute.xlu0 %139
  %143 = vset.pattern.permute.xlu0 18
  %144 = vperm.xlu0 %143, %v14
  %v145 = vpop.permute.xlu0 %144
  %149 = vrot.lane.b32.xlu0 %v124, 126
  %v150 = vpop.permute.xlu0 %149
  %151 = vrot.lane.b32.xlu0 %v125, 126
  %v152 = vpop.permute.xlu0 %151
  %vm153 = vcmask 130048
  %v155 = vsel %vm153, %v150, 0
  %v158 = vsel %vm153, %v152, 0
  %160 = vmatprep.subr.bf16.mxu0 0
  %161 = vmatpush1.bf16.msra.mxu0 0
  %162 = vmatprep.subr.bf16.mxu0 0
  %163 = vmatpush1.bf16.msra.mxu0 0
  %164 = vmatprep.subr.bf16.mxu0 0
  %165 = vmatpush1.bf16.msra.mxu0 0
  %166 = vmatprep.subr.bf16.mxu0 0
  %167 = vmatpush1.bf16.msra.mxu0 0
  %168 = vmatprep.subr.bf16.mxu0 0
  %169 = vmatpush1.bf16.msra.mxu0 0
  %170 = vmatprep.subr.bf16.mxu0 0
  %171 = vmatpush1.bf16.msra.mxu0 0
  %172 = vmatprep.subr.bf16.mxu0 0
  %173 = vmatpush1.bf16.msra.mxu0 0
  %174 = vmatprep.subr.bf16.mxu0 %v127
  %175 = vmatpush1.bf16.msra.mxu0 %v126
  %176 = vmatprep.subr.bf16.mxu0 0
  %177 = vmatpush2.bf16.msra.mxu0 0
  %178 = vmatprep.subr.bf16.mxu0 0
  %179 = vmatpush2.bf16.msra.mxu0 0
  %180 = vmatprep.subr.bf16.mxu0 0
  %181 = vmatpush2.bf16.msra.mxu0 0
  %182 = vmatprep.subr.bf16.mxu0 0
  %183 = vmatpush2.bf16.msra.mxu0 0
  %184 = vmatprep.subr.bf16.mxu0 0
  %185 = vmatpush2.bf16.msra.mxu0 0
  %186 = vmatprep.subr.bf16.mxu0 0
  %187 = vmatpush2.bf16.msra.mxu0 0
  %188 = vmatprep.subr.bf16.mxu0 0
  %189 = vmatpush2.bf16.msra.mxu0 0
  %190 = vmatprep.subr.bf16.mxu0 0
  %191 = vmatpush2.bf16.msra.mxu0 0
  %192 = vmatprep.mubr.bf16.mxu0 0
  %193 = vmatmul.mubr.bf16.gmra.mxu0 %v155
  %v194 = vpop.f32.mrf.mxu0
  %v195 = vadd.f32 %v136, %v194
  %v196 = vpop.f32.mrf.mxu0
  %v197 = vadd.f32 %v136, %v196
  %v198 = vpop.f32.mrf.mxu0
  %v199 = vadd.f32 %v140, %v198
  %v200 = vpop.f32.mrf.mxu0
  %v201 = vadd.f32 %v140, %v200
  %202 = vmatprep.mubr.bf16.mxu0 0
  %203 = vmatmul.mubr.bf16.gmra.mxu0 %v158
  %v204 = vpop.f32.mrf.mxu0
  %v205 = vadd.f32 %v145, %v204
  %v206 = vpop.f32.mrf.mxu0
  %v207 = vadd.f32 %v145, %v206
  %v208 = vpop.f32.mrf.mxu0
  %v209 = vpop.f32.mrf.mxu0
  %210 = vdwg.mxu0
  %211 = vmatprep.subr.bf16.mxu0 0
  %212 = vmatpush1.bf16.msra.mxu0 0
  %213 = vmatprep.subr.bf16.mxu0 0
  %214 = vmatpush1.bf16.msra.mxu0 0
  %215 = vmatprep.subr.bf16.mxu0 0
  %216 = vmatpush1.bf16.msra.mxu0 0
  %217 = vmatprep.subr.bf16.mxu0 0
  %218 = vmatpush1.bf16.msra.mxu0 0
  %219 = vmatprep.subr.bf16.mxu0 0
  %220 = vmatpush1.bf16.msra.mxu0 0
  %221 = vmatprep.subr.bf16.mxu0 0
  %222 = vmatpush1.bf16.msra.mxu0 0
  %223 = vmatprep.subr.bf16.mxu0 0
  %224 = vmatpush1.bf16.msra.mxu0 0
  %225 = vmatprep.subr.bf16.mxu0 %v129
  %226 = vmatpush1.bf16.msra.mxu0 %v128
  %227 = vmatprep.subr.bf16.mxu0 0
  %228 = vmatpush2.bf16.msra.mxu0 0
  %229 = vmatprep.subr.bf16.mxu0 0
  %230 = vmatpush2.bf16.msra.mxu0 0
  %231 = vmatprep.subr.bf16.mxu0 0
  %232 = vmatpush2.bf16.msra.mxu0 0
  %233 = vmatprep.subr.bf16.mxu0 0
  %234 = vmatpush2.bf16.msra.mxu0 0
  %235 = vmatprep.subr.bf16.mxu0 0
  %236 = vmatpush2.bf16.msra.mxu0 0
  %237 = vmatprep.subr.bf16.mxu0 0
  %238 = vmatpush2.bf16.msra.mxu0 0
  %239 = vmatprep.subr.bf16.mxu0 0
  %240 = vmatpush2.bf16.msra.mxu0 0
  %241 = vmatprep.subr.bf16.mxu0 0
  %242 = vmatpush2.bf16.msra.mxu0 0
  %243 = vmatprep.mubr.bf16.mxu0 0
  %244 = vmatmul.mubr.bf16.gmra.mxu0 %v155
  %v245 = vpop.f32.mrf.mxu0
  %v246 = vadd.f32 %v136, %v245
  %v247 = vpop.f32.mrf.mxu0
  %v248 = vadd.f32 %v136, %v247
  %v249 = vpop.f32.mrf.mxu0
  %v250 = vadd.f32 %v140, %v249
  %v251 = vpop.f32.mrf.mxu0
  %v252 = vadd.f32 %v140, %v251
  %253 = vmatprep.mubr.bf16.mxu0 0
  %254 = vmatmul.mubr.bf16.gmra.mxu0 %v158
  %v255 = vpop.f32.mrf.mxu0
  %v256 = vadd.f32 %v145, %v255
  %v257 = vpop.f32.mrf.mxu0
  %v258 = vadd.f32 %v145, %v257
  %v259 = vpop.f32.mrf.mxu0
  %v260 = vpop.f32.mrf.mxu0
  %261 = vdwg.mxu0
  %262 = vmatprep.subr.bf16.mxu0 0
  %263 = vmatpush1.bf16.msra.mxu0 0
  %264 = vmatprep.subr.bf16.mxu0 0
  %265 = vmatpush1.bf16.msra.mxu0 0
  %266 = vmatprep.subr.bf16.mxu0 0
  %267 = vmatpush1.bf16.msra.mxu0 0
  %268 = vmatprep.subr.bf16.mxu0 0
  %269 = vmatpush1.bf16.msra.mxu0 0
  %270 = vmatprep.subr.bf16.mxu0 0
  %271 = vmatpush1.bf16.msra.mxu0 0
  %272 = vmatprep.subr.bf16.mxu0 0
  %273 = vmatpush1.bf16.msra.mxu0 0
  %274 = vmatprep.subr.bf16.mxu0 0
  %275 = vmatpush1.bf16.msra.mxu0 0
  %276 = vmatprep.subr.bf16.mxu0 %v131
  %277 = vmatpush1.bf16.msra.mxu0 %v130
  %278 = vmatprep.subr.bf16.mxu0 0
  %279 = vmatpush2.bf16.msra.mxu0 0
  %280 = vmatprep.subr.bf16.mxu0 0
  %281 = vmatpush2.bf16.msra.mxu0 0
  %282 = vmatprep.subr.bf16.mxu0 0
  %283 = vmatpush2.bf16.msra.mxu0 0
  %284 = vmatprep.subr.bf16.mxu0 0
  %285 = vmatpush2.bf16.msra.mxu0 0
  %286 = vmatprep.subr.bf16.mxu0 0
  %287 = vmatpush2.bf16.msra.mxu0 0
  %288 = vmatprep.subr.bf16.mxu0 0
  %289 = vmatpush2.bf16.msra.mxu0 0
  %290 = vmatprep.subr.bf16.mxu0 0
  %291 = vmatpush2.bf16.msra.mxu0 0
  %292 = vmatprep.subr.bf16.mxu0 0
  %293 = vmatpush2.bf16.msra.mxu0 0
  %294 = vmatprep.mubr.bf16.mxu0 0
  %295 = vmatmul.mubr.bf16.gmra.mxu0 %v155
  %v296 = vpop.f32.mrf.mxu0
  %v297 = vadd.f32 %v136, %v296
  %v298 = vpop.f32.mrf.mxu0
  %v299 = vadd.f32 %v136, %v298
  %v300 = vpop.f32.mrf.mxu0
  %v301 = vadd.f32 %v140, %v300
  %v302 = vpop.f32.mrf.mxu0
  %v303 = vadd.f32 %v140, %v302
  %304 = vmatprep.mubr.bf16.mxu0 0
  %305 = vmatmul.mubr.bf16.gmra.mxu0 %v158
  %v306 = vpop.f32.mrf.mxu0
  %v307 = vadd.f32 %v145, %v306
  %v308 = vpop.f32.mrf.mxu0
  %v309 = vadd.f32 %v145, %v308
  %v310 = vpop.f32.mrf.mxu0
  %v311 = vpop.f32.mrf.mxu0
  %312 = vdwg.mxu0
  %313 = vmatprep.subr.bf16.mxu0 0
  %314 = vmatpush1.bf16.msra.mxu0 0
  %315 = vmatprep.subr.bf16.mxu0 0
  %316 = vmatpush1.bf16.msra.mxu0 0
  %317 = vmatprep.subr.bf16.mxu0 0
  %318 = vmatpush1.bf16.msra.mxu0 0
  %319 = vmatprep.subr.bf16.mxu0 0
  %320 = vmatpush1.bf16.msra.mxu0 0
  %321 = vmatprep.subr.bf16.mxu0 0
  %322 = vmatpush1.bf16.msra.mxu0 0
  %323 = vmatprep.subr.bf16.mxu0 0
  %324 = vmatpush1.bf16.msra.mxu0 0
  %325 = vmatprep.subr.bf16.mxu0 0
  %326 = vmatpush1.bf16.msra.mxu0 0
  %327 = vmatprep.subr.bf16.mxu0 %v133
  %328 = vmatpush1.bf16.msra.mxu0 %v132
  %329 = vmatprep.subr.bf16.mxu0 0
  %330 = vmatpush2.bf16.msra.mxu0 0
  %331 = vmatprep.subr.bf16.mxu0 0
  %332 = vmatpush2.bf16.msra.mxu0 0
  %333 = vmatprep.subr.bf16.mxu0 0
  %334 = vmatpush2.bf16.msra.mxu0 0
  %335 = vmatprep.subr.bf16.mxu0 0
  %336 = vmatpush2.bf16.msra.mxu0 0
  %337 = vmatprep.subr.bf16.mxu0 0
  %338 = vmatpush2.bf16.msra.mxu0 0
  %339 = vmatprep.subr.bf16.mxu0 0
  %340 = vmatpush2.bf16.msra.mxu0 0
  %341 = vmatprep.subr.bf16.mxu0 0
  %342 = vmatpush2.bf16.msra.mxu0 0
  %343 = vmatprep.subr.bf16.mxu0 0
  %344 = vmatpush2.bf16.msra.mxu0 0
  %345 = vmatprep.mubr.bf16.mxu0 0
  %346 = vmatmul.mubr.bf16.gmra.mxu0 %v155
  %v347 = vpop.f32.mrf.mxu0
  %v348 = vadd.f32 %v136, %v347
  %v349 = vpop.f32.mrf.mxu0
  %v350 = vadd.f32 %v136, %v349
  %v351 = vpop.f32.mrf.mxu0
  %v352 = vadd.f32 %v140, %v351
  %v353 = vpop.f32.mrf.mxu0
  %v354 = vadd.f32 %v140, %v353
  %355 = vmatprep.mubr.bf16.mxu0 0
  %356 = vmatmul.mubr.bf16.gmra.mxu0 %v158
  %v357 = vpop.f32.mrf.mxu0
  %v358 = vadd.f32 %v145, %v357
  %v359 = vpop.f32.mrf.mxu0
  %v360 = vadd.f32 %v145, %v359
  %v361 = vpop.f32.mrf.mxu0
  %v362 = vpop.f32.mrf.mxu0
  %363 = vdwg.mxu0
  %v364 = vmax.f32 %v195, 0.0
  %v365 = vmax.f32 %v197, 0.0
  %v366 = vmax.f32 %v246, 0.0
  %v367 = vmax.f32 %v248, 0.0
  %v368 = vmax.f32 %v297, 0.0
  %v369 = vmax.f32 %v299, 0.0
  %v370 = vmax.f32 %v348, 0.0
  %v371 = vmax.f32 %v350, 0.0
  %v372 = vmax.f32 %v199, 0.0
  %v373 = vmax.f32 %v201, 0.0
  %v374 = vmax.f32 %v250, 0.0
  %v375 = vmax.f32 %v252, 0.0
  %v376 = vmax.f32 %v301, 0.0
  %v377 = vmax.f32 %v303, 0.0
  %v378 = vmax.f32 %v352, 0.0
  %v379 = vmax.f32 %v354, 0.0
  %v380 = vmax.f32 %v205, 0.0
  %v381 = vmax.f32 %v207, 0.0
  %v382 = vmax.f32 %v256, 0.0
  %v383 = vmax.f32 %v258, 0.0
  %v384 = vmax.f32 %v307, 0.0
  %v385 = vmax.f32 %v309, 0.0
  %v386 = vmax.f32 %v358, 0.0
  %v387 = vmax.f32 %v360, 0.0
  %v388 = vpack.c.bf16 %v15, %v14
  %v389 = vpack.c.bf16 %v372, %v364
  %v390 = vpack.c.bf16 %v373, %v365
  %v391 = vpack.c.bf16 %v374, %v366
  %v392 = vpack.c.bf16 %v375, %v367
  %v393 = vpack.c.bf16 %v376, %v368
  %v394 = vpack.c.bf16 %v377, %v369
  %v395 = vpack.c.bf16 %v378, %v370
  %v396 = vpack.c.bf16 %v379, %v371
  %v397 = vpack.c.bf16 %v380, %v380
  %v398 = vpack.c.bf16 %v381, %v381
  %v399 = vpack.c.bf16 %v382, %v382
  %v400 = vpack.c.bf16 %v383, %v383
  %v401 = vpack.c.bf16 %v384, %v384
  %v402 = vpack.c.bf16 %v385, %v385
  %v403 = vpack.c.bf16 %v386, %v386
  %v404 = vpack.c.bf16 %v387, %v387
  %405 = vset.pattern.permute.xlu0 43
  %406 = vperm.xlu0 %405, %v12
  %v407 = vpop.permute.xlu0 %406
  %409 = vset.pattern.permute.xlu0 43
  %410 = vperm.xlu0 %409, %v13
  %v411 = vpop.permute.xlu0 %410
  %413 = vset.pattern.permute.xlu0 43
  %414 = vperm.xlu0 %413, %v14
  %v415 = vpop.permute.xlu0 %414
  %418 = vset.pattern.permute.xlu0 43
  %419 = vperm.xlu0 %418, %v15
  %v420 = vpop.permute.xlu0 %419
  %423 = vrot.lane.b32.xlu0 %v124, 109
  %v424 = vpop.permute.xlu0 %423
  %425 = vrot.lane.b32.xlu0 %v388, 109
  %v426 = vpop.permute.xlu0 %425
  %vm427 = vcmask 195584
  %v429 = vsel %vm427, %v424, 0
  %v432 = vsel %vm427, %v426, 0
  %vm434 = vcmask 1043456
  %v436 = vsel %vm434, %v397, 0
  %v439 = vsel %vm434, %v398, 0
  %v442 = vsel %vm434, %v399, 0
  %v445 = vsel %vm434, %v400, 0
  %v448 = vsel %vm434, %v401, 0
  %v451 = vsel %vm434, %v402, 0
  %v454 = vsel %vm434, %v403, 0
  %v457 = vsel %vm434, %v404, 0
  %459 = vmatprep.subr.bf16.mxu0 0
  %460 = vmatpush1.bf16.msra.mxu0 0
  %461 = vmatprep.subr.bf16.mxu0 0
  %462 = vmatpush1.bf16.msra.mxu0 0
  %463 = vmatprep.subr.bf16.mxu0 0
  %464 = vmatpush1.bf16.msra.mxu0 0
  %465 = vmatprep.subr.bf16.mxu0 0
  %466 = vmatpush1.bf16.msra.mxu0 0
  %467 = vmatprep.subr.bf16.mxu0 0
  %468 = vmatpush1.bf16.msra.mxu0 0
  %469 = vmatprep.subr.bf16.mxu0 0
  %470 = vmatpush1.bf16.msra.mxu0 0
  %471 = vmatprep.subr.bf16.mxu0 %v439
  %472 = vmatpush1.bf16.msra.mxu0 %v436
  %473 = vmatprep.subr.bf16.mxu0 %v390
  %474 = vmatpush1.bf16.msra.mxu0 %v389
  %475 = vmatprep.subr.bf16.mxu0 0
  %476 = vmatpush2.bf16.msra.mxu0 0
  %477 = vmatprep.subr.bf16.mxu0 0
  %478 = vmatpush2.bf16.msra.mxu0 0
  %479 = vmatprep.subr.bf16.mxu0 0
  %480 = vmatpush2.bf16.msra.mxu0 0
  %481 = vmatprep.subr.bf16.mxu0 0
  %482 = vmatpush2.bf16.msra.mxu0 0
  %483 = vmatprep.subr.bf16.mxu0 0
  %484 = vmatpush2.bf16.msra.mxu0 0
  %485 = vmatprep.subr.bf16.mxu0 0
  %486 = vmatpush2.bf16.msra.mxu0 0
  %487 = vmatprep.subr.bf16.mxu0 0
  %488 = vmatpush2.bf16.msra.mxu0 0
  %489 = vmatprep.subr.bf16.mxu0 0
  %490 = vmatpush2.bf16.msra.mxu0 0
  %491 = vmatprep.mubr.bf16.mxu0 0
  %492 = vmatmul.mubr.bf16.gmra.mxu0 %v429
  %v493 = vpop.f32.mrf.mxu0
  %v494 = vadd.f32 %v407, %v493
  %v495 = vpop.f32.mrf.mxu0
  %v496 = vadd.f32 %v407, %v495
  %v497 = vpop.f32.mrf.mxu0
  %v498 = vadd.f32 %v411, %v497
  %v499 = vpop.f32.mrf.mxu0
  %v500 = vadd.f32 %v411, %v499
  %501 = vmatprep.mubr.bf16.mxu0 0
  %502 = vmatmul.mubr.bf16.gmra.mxu0 %v432
  %v503 = vpop.f32.mrf.mxu0
  %v504 = vadd.f32 %v415, %v503
  %v505 = vpop.f32.mrf.mxu0
  %v506 = vadd.f32 %v415, %v505
  %v507 = vpop.f32.mrf.mxu0
  %v508 = vadd.f32 %v420, %v507
  %v509 = vpop.f32.mrf.mxu0
  %v510 = vadd.f32 %v420, %v509
  %511 = vdwg.mxu0
  %512 = vmatprep.subr.bf16.mxu0 0
  %513 = vmatpush1.bf16.msra.mxu0 0
  %514 = vmatprep.subr.bf16.mxu0 0
  %515 = vmatpush1.bf16.msra.mxu0 0
  %516 = vmatprep.subr.bf16.mxu0 0
  %517 = vmatpush1.bf16.msra.mxu0 0
  %518 = vmatprep.subr.bf16.mxu0 0
  %519 = vmatpush1.bf16.msra.mxu0 0
  %520 = vmatprep.subr.bf16.mxu0 0
  %521 = vmatpush1.bf16.msra.mxu0 0
  %522 = vmatprep.subr.bf16.mxu0 0
  %523 = vmatpush1.bf16.msra.mxu0 0
  %524 = vmatprep.subr.bf16.mxu0 %v445
  %525 = vmatpush1.bf16.msra.mxu0 %v442
  %526 = vmatprep.subr.bf16.mxu0 %v392
  %527 = vmatpush1.bf16.msra.mxu0 %v391
  %528 = vmatprep.subr.bf16.mxu0 0
  %529 = vmatpush2.bf16.msra.mxu0 0
  %530 = vmatprep.subr.bf16.mxu0 0
  %531 = vmatpush2.bf16.msra.mxu0 0
  %532 = vmatprep.subr.bf16.mxu0 0
  %533 = vmatpush2.bf16.msra.mxu0 0
  %534 = vmatprep.subr.bf16.mxu0 0
  %535 = vmatpush2.bf16.msra.mxu0 0
  %536 = vmatprep.subr.bf16.mxu0 0
  %537 = vmatpush2.bf16.msra.mxu0 0
  %538 = vmatprep.subr.bf16.mxu0 0
  %539 = vmatpush2.bf16.msra.mxu0 0
  %540 = vmatprep.subr.bf16.mxu0 0
  %541 = vmatpush2.bf16.msra.mxu0 0
  %542 = vmatprep.subr.bf16.mxu0 0
  %543 = vmatpush2.bf16.msra.mxu0 0
  %544 = vmatprep.mubr.bf16.mxu0 0
  %545 = vmatmul.mubr.bf16.gmra.mxu0 %v429
  %v546 = vpop.f32.mrf.mxu0
  %v547 = vadd.f32 %v407, %v546
  %v548 = vpop.f32.mrf.mxu0
  %v549 = vadd.f32 %v407, %v548
  %v550 = vpop.f32.mrf.mxu0
  %v551 = vadd.f32 %v411, %v550
  %v552 = vpop.f32.mrf.mxu0
  %v553 = vadd.f32 %v411, %v552
  %554 = vmatprep.mubr.bf16.mxu0 0
  %555 = vmatmul.mubr.bf16.gmra.mxu0 %v432
  %v556 = vpop.f32.mrf.mxu0
  %v557 = vadd.f32 %v415, %v556
  %v558 = vpop.f32.mrf.mxu0
  %v559 = vadd.f32 %v415, %v558
  %v560 = vpop.f32.mrf.mxu0
  %v561 = vadd.f32 %v420, %v560
  %v562 = vpop.f32.mrf.mxu0
  %v563 = vadd.f32 %v420, %v562
  %564 = vdwg.mxu0
  %565 = vmatprep.subr.bf16.mxu0 0
  %566 = vmatpush1.bf16.msra.mxu0 0
  %567 = vmatprep.subr.bf16.mxu0 0
  %568 = vmatpush1.bf16.msra.mxu0 0
  %569 = vmatprep.subr.bf16.mxu0 0
  %570 = vmatpush1.bf16.msra.mxu0 0
  %571 = vmatprep.subr.bf16.mxu0 0
  %572 = vmatpush1.bf16.msra.mxu0 0
  %573 = vmatprep.subr.bf16.mxu0 0
  %574 = vmatpush1.bf16.msra.mxu0 0
  %575 = vmatprep.subr.bf16.mxu0 0
  %576 = vmatpush1.bf16.msra.mxu0 0
  %577 = vmatprep.subr.bf16.mxu0 %v451
  %578 = vmatpush1.bf16.msra.mxu0 %v448
  %579 = vmatprep.subr.bf16.mxu0 %v394
  %580 = vmatpush1.bf16.msra.mxu0 %v393
  %581 = vmatprep.subr.bf16.mxu0 0
  %582 = vmatpush2.bf16.msra.mxu0 0
  %583 = vmatprep.subr.bf16.mxu0 0
  %584 = vmatpush2.bf16.msra.mxu0 0
  %585 = vmatprep.subr.bf16.mxu0 0
  %586 = vmatpush2.bf16.msra.mxu0 0
  %587 = vmatprep.subr.bf16.mxu0 0
  %588 = vmatpush2.bf16.msra.mxu0 0
  %589 = vmatprep.subr.bf16.mxu0 0
  %590 = vmatpush2.bf16.msra.mxu0 0
  %591 = vmatprep.subr.bf16.mxu0 0
  %592 = vmatpush2.bf16.msra.mxu0 0
  %593 = vmatprep.subr.bf16.mxu0 0
  %594 = vmatpush2.bf16.msra.mxu0 0
  %595 = vmatprep.subr.bf16.mxu0 0
  %596 = vmatpush2.bf16.msra.mxu0 0
  %597 = vmatprep.mubr.bf16.mxu0 0
  %598 = vmatmul.mubr.bf16.gmra.mxu0 %v429
  %v599 = vpop.f32.mrf.mxu0
  %v600 = vadd.f32 %v407, %v599
  %v601 = vpop.f32.mrf.mxu0
  %v602 = vadd.f32 %v407, %v601
  %v603 = vpop.f32.mrf.mxu0
  %v604 = vadd.f32 %v411, %v603
  %v605 = vpop.f32.mrf.mxu0
  %v606 = vadd.f32 %v411, %v605
  %607 = vmatprep.mubr.bf16.mxu0 0
  %608 = vmatmul.mubr.bf16.gmra.mxu0 %v432
  %v609 = vpop.f32.mrf.mxu0
  %v610 = vadd.f32 %v415, %v609
  %v611 = vpop.f32.mrf.mxu0
  %v612 = vadd.f32 %v415, %v611
  %v613 = vpop.f32.mrf.mxu0
  %v614 = vadd.f32 %v420, %v613
  %v615 = vpop.f32.mrf.mxu0
  %v616 = vadd.f32 %v420, %v615
  %617 = vdwg.mxu0
  %618 = vmatprep.subr.bf16.mxu0 0
  %619 = vmatpush1.bf16.msra.mxu0 0
  %620 = vmatprep.subr.bf16.mxu0 0
  %621 = vmatpush1.bf16.msra.mxu0 0
  %622 = vmatprep.subr.bf16.mxu0 0
  %623 = vmatpush1.bf16.msra.mxu0 0
  %624 = vmatprep.subr.bf16.mxu0 0
  %625 = vmatpush1.bf16.msra.mxu0 0
  %626 = vmatprep.subr.bf16.mxu0 0
  %627 = vmatpush1.bf16.msra.mxu0 0
  %628 = vmatprep.subr.bf16.mxu0 0
  %629 = vmatpush1.bf16.msra.mxu0 0
  %630 = vmatprep.subr.bf16.mxu0 %v457
  %631 = vmatpush1.bf16.msra.mxu0 %v454
  %632 = vmatprep.subr.bf16.mxu0 %v396
  %633 = vmatpush1.bf16.msra.mxu0 %v395
  %634 = vmatprep.subr.bf16.mxu0 0
  %635 = vmatpush2.bf16.msra.mxu0 0
  %636 = vmatprep.subr.bf16.mxu0 0
  %637 = vmatpush2.bf16.msra.mxu0 0
  %638 = vmatprep.subr.bf16.mxu0 0
  %639 = vmatpush2.bf16.msra.mxu0 0
  %640 = vmatprep.subr.bf16.mxu0 0
  %641 = vmatpush2.bf16.msra.mxu0 0
  %642 = vmatprep.subr.bf16.mxu0 0
  %643 = vmatpush2.bf16.msra.mxu0 0
  %644 = vmatprep.subr.bf16.mxu0 0
  %645 = vmatpush2.bf16.msra.mxu0 0
  %646 = vmatprep.subr.bf16.mxu0 0
  %647 = vmatpush2.bf16.msra.mxu0 0
  %648 = vmatprep.subr.bf16.mxu0 0
  %649 = vmatpush2.bf16.msra.mxu0 0
  %650 = vmatprep.mubr.bf16.mxu0 0
  %651 = vmatmul.mubr.bf16.gmra.mxu0 %v429
  %v652 = vpop.f32.mrf.mxu0
  %v653 = vadd.f32 %v407, %v652
  %v654 = vpop.f32.mrf.mxu0
  %v655 = vadd.f32 %v407, %v654
  %v656 = vpop.f32.mrf.mxu0
  %v657 = vadd.f32 %v411, %v656
  %v658 = vpop.f32.mrf.mxu0
  %v659 = vadd.f32 %v411, %v658
  %660 = vmatprep.mubr.bf16.mxu0 0
  %661 = vmatmul.mubr.bf16.gmra.mxu0 %v432
  %v662 = vpop.f32.mrf.mxu0
  %v663 = vadd.f32 %v415, %v662
  %v664 = vpop.f32.mrf.mxu0
  %v665 = vadd.f32 %v415, %v664
  %v666 = vpop.f32.mrf.mxu0
  %v667 = vadd.f32 %v420, %v666
  %v668 = vpop.f32.mrf.mxu0
  %v669 = vadd.f32 %v420, %v668
  %670 = vdwg.mxu0
  %v671 = vmax.f32 %v494, 0.0
  %v672 = vmax.f32 %v496, 0.0
  %v673 = vmax.f32 %v547, 0.0
  %v674 = vmax.f32 %v549, 0.0
  %v675 = vmax.f32 %v600, 0.0
  %v676 = vmax.f32 %v602, 0.0
  %v677 = vmax.f32 %v653, 0.0
  %v678 = vmax.f32 %v655, 0.0
  %v679 = vmax.f32 %v498, 0.0
  %v680 = vmax.f32 %v500, 0.0
  %v681 = vmax.f32 %v551, 0.0
  %v682 = vmax.f32 %v553, 0.0
  %v683 = vmax.f32 %v604, 0.0
  %v684 = vmax.f32 %v606, 0.0
  %v685 = vmax.f32 %v657, 0.0
  %v686 = vmax.f32 %v659, 0.0
  %v687 = vmax.f32 %v504, 0.0
  %v688 = vmax.f32 %v506, 0.0
  %v689 = vmax.f32 %v557, 0.0
  %v690 = vmax.f32 %v559, 0.0
  %v691 = vmax.f32 %v610, 0.0
  %v692 = vmax.f32 %v612, 0.0
  %v693 = vmax.f32 %v663, 0.0
  %v694 = vmax.f32 %v665, 0.0
  %v695 = vmax.f32 %v508, 0.0
  %v696 = vmax.f32 %v510, 0.0
  %v697 = vmax.f32 %v561, 0.0
  %v698 = vmax.f32 %v563, 0.0
  %v699 = vmax.f32 %v614, 0.0
  %v700 = vmax.f32 %v616, 0.0
  %v701 = vmax.f32 %v667, 0.0
  %v702 = vmax.f32 %v669, 0.0
  %v703 = vpack.c.bf16 %v679, %v671
  %v704 = vpack.c.bf16 %v680, %v672
  %v705 = vpack.c.bf16 %v681, %v673
  %v706 = vpack.c.bf16 %v682, %v674
  %v707 = vpack.c.bf16 %v683, %v675
  %v708 = vpack.c.bf16 %v684, %v676
  %v709 = vpack.c.bf16 %v685, %v677
  %v710 = vpack.c.bf16 %v686, %v678
  %v711 = vpack.c.bf16 %v695, %v687
  %v712 = vpack.c.bf16 %v696, %v688
  %v713 = vpack.c.bf16 %v697, %v689
  %v714 = vpack.c.bf16 %v698, %v690
  %v715 = vpack.c.bf16 %v699, %v691
  %v716 = vpack.c.bf16 %v700, %v692
  %v717 = vpack.c.bf16 %v701, %v693
  %v718 = vpack.c.bf16 %v702, %v694
  %719 = vset.pattern.permute.xlu0 76
  %720 = vperm.xlu0 %719, %v12
  %v721 = vpop.permute.xlu0 %720
  %723 = vset.pattern.permute.xlu0 76
  %724 = vperm.xlu0 %723, %v13
  %v725 = vpop.permute.xlu0 %724
  %727 = vset.pattern.permute.xlu0 76
  %728 = vperm.xlu0 %727, %v14
  %v729 = vpop.permute.xlu0 %728
  %731 = vset.pattern.permute.xlu0 76
  %732 = vperm.xlu0 %731, %v15
  %v733 = vpop.permute.xlu0 %732
  %735 = vrot.lane.b32.xlu0 %v124, 84
  %v736 = vpop.permute.xlu0 %735
  %737 = vrot.lane.b32.xlu0 %v388, 84
  %v738 = vpop.permute.xlu0 %737
  %vm739 = vcmask 261120
  %v741 = vsel %vm739, %v736, 0
  %v744 = vsel %vm739, %v738, 0
  %746 = vmatprep.subr.bf16.mxu0 0
  %747 = vmatpush1.bf16.msra.mxu0 0
  %748 = vmatprep.subr.bf16.mxu0 0
  %749 = vmatpush1.bf16.msra.mxu0 0
  %750 = vmatprep.subr.bf16.mxu0 0
  %751 = vmatpush1.bf16.msra.mxu0 0
  %752 = vmatprep.subr.bf16.mxu0 0
  %753 = vmatpush1.bf16.msra.mxu0 0
  %754 = vmatprep.subr.bf16.mxu0 0
  %755 = vmatpush1.bf16.msra.mxu0 0
  %756 = vmatprep.subr.bf16.mxu0 0
  %757 = vmatpush1.bf16.msra.mxu0 0
  %758 = vmatprep.subr.bf16.mxu0 %v712
  %759 = vmatpush1.bf16.msra.mxu0 %v711
  %760 = vmatprep.subr.bf16.mxu0 %v704
  %761 = vmatpush1.bf16.msra.mxu0 %v703
  %762 = vmatprep.subr.bf16.mxu0 0
  %763 = vmatpush2.bf16.msra.mxu0 0
  %764 = vmatprep.subr.bf16.mxu0 0
  %765 = vmatpush2.bf16.msra.mxu0 0
  %766 = vmatprep.subr.bf16.mxu0 0
  %767 = vmatpush2.bf16.msra.mxu0 0
  %768 = vmatprep.subr.bf16.mxu0 0
  %769 = vmatpush2.bf16.msra.mxu0 0
  %770 = vmatprep.subr.bf16.mxu0 0
  %771 = vmatpush2.bf16.msra.mxu0 0
  %772 = vmatprep.subr.bf16.mxu0 0
  %773 = vmatpush2.bf16.msra.mxu0 0
  %774 = vmatprep.subr.bf16.mxu0 0
  %775 = vmatpush2.bf16.msra.mxu0 0
  %776 = vmatprep.subr.bf16.mxu0 0
  %777 = vmatpush2.bf16.msra.mxu0 0
  %778 = vmatprep.mubr.bf16.mxu0 0
  %779 = vmatmul.mubr.bf16.gmra.mxu0 %v741
  %v780 = vpop.f32.mrf.mxu0
  %v781 = vadd.f32 %v721, %v780
  %v782 = vpop.f32.mrf.mxu0
  %v783 = vadd.f32 %v721, %v782
  %v784 = vpop.f32.mrf.mxu0
  %v785 = vadd.f32 %v725, %v784
  %v786 = vpop.f32.mrf.mxu0
  %v787 = vadd.f32 %v725, %v786
  %788 = vmatprep.mubr.bf16.mxu0 0
  %789 = vmatmul.mubr.bf16.gmra.mxu0 %v744
  %v790 = vpop.f32.mrf.mxu0
  %v791 = vadd.f32 %v729, %v790
  %v792 = vpop.f32.mrf.mxu0
  %v793 = vadd.f32 %v729, %v792
  %v794 = vpop.f32.mrf.mxu0
  %v795 = vadd.f32 %v733, %v794
  %v796 = vpop.f32.mrf.mxu0
  %v797 = vadd.f32 %v733, %v796
  %798 = vdwg.mxu0
  %799 = vmatprep.subr.bf16.mxu0 0
  %800 = vmatpush1.bf16.msra.mxu0 0
  %801 = vmatprep.subr.bf16.mxu0 0
  %802 = vmatpush1.bf16.msra.mxu0 0
  %803 = vmatprep.subr.bf16.mxu0 0
  %804 = vmatpush1.bf16.msra.mxu0 0
  %805 = vmatprep.subr.bf16.mxu0 0
  %806 = vmatpush1.bf16.msra.mxu0 0
  %807 = vmatprep.subr.bf16.mxu0 0
  %808 = vmatpush1.bf16.msra.mxu0 0
  %809 = vmatprep.subr.bf16.mxu0 0
  %810 = vmatpush1.bf16.msra.mxu0 0
  %811 = vmatprep.subr.bf16.mxu0 %v714
  %812 = vmatpush1.bf16.msra.mxu0 %v713
  %813 = vmatprep.subr.bf16.mxu0 %v706
  %814 = vmatpush1.bf16.msra.mxu0 %v705
  %815 = vmatprep.subr.bf16.mxu0 0
  %816 = vmatpush2.bf16.msra.mxu0 0
  %817 = vmatprep.subr.bf16.mxu0 0
  %818 = vmatpush2.bf16.msra.mxu0 0
  %819 = vmatprep.subr.bf16.mxu0 0
  %820 = vmatpush2.bf16.msra.mxu0 0
  %821 = vmatprep.subr.bf16.mxu0 0
  %822 = vmatpush2.bf16.msra.mxu0 0
  %823 = vmatprep.subr.bf16.mxu0 0
  %824 = vmatpush2.bf16.msra.mxu0 0
  %825 = vmatprep.subr.bf16.mxu0 0
  %826 = vmatpush2.bf16.msra.mxu0 0
  %827 = vmatprep.subr.bf16.mxu0 0
  %828 = vmatpush2.bf16.msra.mxu0 0
  %829 = vmatprep.subr.bf16.mxu0 0
  %830 = vmatpush2.bf16.msra.mxu0 0
  %831 = vmatprep.mubr.bf16.mxu0 0
  %832 = vmatmul.mubr.bf16.gmra.mxu0 %v741
  %v833 = vpop.f32.mrf.mxu0
  %v834 = vadd.f32 %v721, %v833
  %v835 = vpop.f32.mrf.mxu0
  %v836 = vadd.f32 %v721, %v835
  %v837 = vpop.f32.mrf.mxu0
  %v838 = vadd.f32 %v725, %v837
  %v839 = vpop.f32.mrf.mxu0
  %v840 = vadd.f32 %v725, %v839
  %841 = vmatprep.mubr.bf16.mxu0 0
  %842 = vmatmul.mubr.bf16.gmra.mxu0 %v744
  %v843 = vpop.f32.mrf.mxu0
  %v844 = vadd.f32 %v729, %v843
  %v845 = vpop.f32.mrf.mxu0
  %v846 = vadd.f32 %v729, %v845
  %v847 = vpop.f32.mrf.mxu0
  %v848 = vadd.f32 %v733, %v847
  %v849 = vpop.f32.mrf.mxu0
  %v850 = vadd.f32 %v733, %v849
  %851 = vdwg.mxu0
  %852 = vmatprep.subr.bf16.mxu0 0
  %853 = vmatpush1.bf16.msra.mxu0 0
  %854 = vmatprep.subr.bf16.mxu0 0
  %855 = vmatpush1.bf16.msra.mxu0 0
  %856 = vmatprep.subr.bf16.mxu0 0
  %857 = vmatpush1.bf16.msra.mxu0 0
  %858 = vmatprep.subr.bf16.mxu0 0
  %859 = vmatpush1.bf16.msra.mxu0 0
  %860 = vmatprep.subr.bf16.mxu0 0
  %861 = vmatpush1.bf16.msra.mxu0 0
  %862 = vmatprep.subr.bf16.mxu0 0
  %863 = vmatpush1.bf16.msra.mxu0 0
  %864 = vmatprep.subr.bf16.mxu0 %v716
  %865 = vmatpush1.bf16.msra.mxu0 %v715
  %866 = vmatprep.subr.bf16.mxu0 %v708
  %867 = vmatpush1.bf16.msra.mxu0 %v707
  %868 = vmatprep.subr.bf16.mxu0 0
  %869 = vmatpush2.bf16.msra.mxu0 0
  %870 = vmatprep.subr.bf16.mxu0 0
  %871 = vmatpush2.bf16.msra.mxu0 0
  %872 = vmatprep.subr.bf16.mxu0 0
  %873 = vmatpush2.bf16.msra.mxu0 0
  %874 = vmatprep.subr.bf16.mxu0 0
  %875 = vmatpush2.bf16.msra.mxu0 0
  %876 = vmatprep.subr.bf16.mxu0 0
  %877 = vmatpush2.bf16.msra.mxu0 0
  %878 = vmatprep.subr.bf16.mxu0 0
  %879 = vmatpush2.bf16.msra.mxu0 0
  %880 = vmatprep.subr.bf16.mxu0 0
  %881 = vmatpush2.bf16.msra.mxu0 0
  %882 = vmatprep.subr.bf16.mxu0 0
  %883 = vmatpush2.bf16.msra.mxu0 0
  %884 = vmatprep.mubr.bf16.mxu0 0
  %885 = vmatmul.mubr.bf16.gmra.mxu0 %v741
  %v886 = vpop.f32.mrf.mxu0
  %v887 = vadd.f32 %v721, %v886
  %v888 = vpop.f32.mrf.mxu0
  %v889 = vadd.f32 %v721, %v888
  %v890 = vpop.f32.mrf.mxu0
  %v891 = vadd.f32 %v725, %v890
  %v892 = vpop.f32.mrf.mxu0
  %v893 = vadd.f32 %v725, %v892
  %894 = vmatprep.mubr.bf16.mxu0 0
  %895 = vmatmul.mubr.bf16.gmra.mxu0 %v744
  %v896 = vpop.f32.mrf.mxu0
  %v897 = vadd.f32 %v729, %v896
  %v898 = vpop.f32.mrf.mxu0
  %v899 = vadd.f32 %v729, %v898
  %v900 = vpop.f32.mrf.mxu0
  %v901 = vadd.f32 %v733, %v900
  %v902 = vpop.f32.mrf.mxu0
  %v903 = vadd.f32 %v733, %v902
  %904 = vdwg.mxu0
  %905 = vmatprep.subr.bf16.mxu0 0
  %906 = vmatpush1.bf16.msra.mxu0 0
  %907 = vmatprep.subr.bf16.mxu0 0
  %908 = vmatpush1.bf16.msra.mxu0 0
  %909 = vmatprep.subr.bf16.mxu0 0
  %910 = vmatpush1.bf16.msra.mxu0 0
  %911 = vmatprep.subr.bf16.mxu0 0
  %912 = vmatpush1.bf16.msra.mxu0 0
  %913 = vmatprep.subr.bf16.mxu0 0
  %914 = vmatpush1.bf16.msra.mxu0 0
  %915 = vmatprep.subr.bf16.mxu0 0
  %916 = vmatpush1.bf16.msra.mxu0 0
  %917 = vmatprep.subr.bf16.mxu0 %v718
  %918 = vmatpush1.bf16.msra.mxu0 %v717
  %919 = vmatprep.subr.bf16.mxu0 %v710
  %920 = vmatpush1.bf16.msra.mxu0 %v709
  %921 = vmatprep.subr.bf16.mxu0 0
  %922 = vmatpush2.bf16.msra.mxu0 0
  %923 = vmatprep.subr.bf16.mxu0 0
  %924 = vmatpush2.bf16.msra.mxu0 0
  %925 = vmatprep.subr.bf16.mxu0 0
  %926 = vmatpush2.bf16.msra.mxu0 0
  %927 = vmatprep.subr.bf16.mxu0 0
  %928 = vmatpush2.bf16.msra.mxu0 0
  %929 = vmatprep.subr.bf16.mxu0 0
  %930 = vmatpush2.bf16.msra.mxu0 0
  %931 = vmatprep.subr.bf16.mxu0 0
  %932 = vmatpush2.bf16.msra.mxu0 0
  %933 = vmatprep.subr.bf16.mxu0 0
  %934 = vmatpush2.bf16.msra.mxu0 0
  %935 = vmatprep.subr.bf16.mxu0 0
  %936 = vmatpush2.bf16.msra.mxu0 0
  %937 = vmatprep.mubr.bf16.mxu0 0
  %938 = vmatmul.mubr.bf16.gmra.mxu0 %v741
  %v939 = vpop.f32.mrf.mxu0
  %v940 = vadd.f32 %v721, %v939
  %v941 = vpop.f32.mrf.mxu0
  %v942 = vadd.f32 %v721, %v941
  %v943 = vpop.f32.mrf.mxu0
  %v944 = vadd.f32 %v725, %v943
  %v945 = vpop.f32.mrf.mxu0
  %v946 = vadd.f32 %v725, %v945
  %947 = vmatprep.mubr.bf16.mxu0 0
  %948 = vmatmul.mubr.bf16.gmra.mxu0 %v744
  %v949 = vpop.f32.mrf.mxu0
  %v950 = vadd.f32 %v729, %v949
  %v951 = vpop.f32.mrf.mxu0
  %v952 = vadd.f32 %v729, %v951
  %v953 = vpop.f32.mrf.mxu0
  %v954 = vadd.f32 %v733, %v953
  %v955 = vpop.f32.mrf.mxu0
  %v956 = vadd.f32 %v733, %v955
  %957 = vdwg.mxu0
  %v958 = vmax.f32 %v781, 0.0
  %v959 = vmax.f32 %v783, 0.0
  %v960 = vmax.f32 %v834, 0.0
  %v961 = vmax.f32 %v836, 0.0
  %v962 = vmax.f32 %v887, 0.0
  %v963 = vmax.f32 %v889, 0.0
  %v964 = vmax.f32 %v940, 0.0
  %v965 = vmax.f32 %v942, 0.0
  %v966 = vmax.f32 %v785, 0.0
  %v967 = vmax.f32 %v787, 0.0
  %v968 = vmax.f32 %v838, 0.0
  %v969 = vmax.f32 %v840, 0.0
  %v970 = vmax.f32 %v891, 0.0
  %v971 = vmax.f32 %v893, 0.0
  %v972 = vmax.f32 %v944, 0.0
  %v973 = vmax.f32 %v946, 0.0
  %v974 = vmax.f32 %v791, 0.0
  %v975 = vmax.f32 %v793, 0.0
  %v976 = vmax.f32 %v844, 0.0
  %v977 = vmax.f32 %v846, 0.0
  %v978 = vmax.f32 %v897, 0.0
  %v979 = vmax.f32 %v899, 0.0
  %v980 = vmax.f32 %v950, 0.0
  %v981 = vmax.f32 %v952, 0.0
  %v982 = vmax.f32 %v795, 0.0
  %v983 = vmax.f32 %v797, 0.0
  %v984 = vmax.f32 %v848, 0.0
  %v985 = vmax.f32 %v850, 0.0
  %v986 = vmax.f32 %v901, 0.0
  %v987 = vmax.f32 %v903, 0.0
  %v988 = vmax.f32 %v954, 0.0
  %v989 = vmax.f32 %v956, 0.0
  %990 = vst [vmem:[%s2] sm:$0xff] %v958
  %991 = vst [vmem:[%s2 + $0x8] sm:$0xff] %v959
  %992 = vst [vmem:[%s2 + $0x10] sm:$0xff] %v960
  %993 = vst [vmem:[%s2 + $0x18] sm:$0xff] %v961
  %994 = vst [vmem:[%s2 + $0x20] sm:$0xff] %v962
  %995 = vst [vmem:[%s2 + $0x28] sm:$0xff] %v963
  %996 = vst [vmem:[%s2 + $0x30] sm:$0xff] %v964
  %997 = vst [vmem:[%s2 + $0x38] sm:$0xff] %v965
  %998 = vst [vmem:[%s2 + $0x40] sm:$0xff] %v966
  %999 = vst [vmem:[%s2 + $0x48] sm:$0xff] %v967
  %1000 = vst [vmem:[%s2 + $0x50] sm:$0xff] %v968
  %1001 = vst [vmem:[%s2 + $0x58] sm:$0xff] %v969
  %1002 = vst [vmem:[%s2 + $0x60] sm:$0xff] %v970
  %1003 = vst [vmem:[%s2 + $0x68] sm:$0xff] %v971
  %1004 = vst [vmem:[%s2 + $0x70] sm:$0xff] %v972
  %1005 = vst [vmem:[%s2 + $0x78] sm:$0xff] %v973
  %1006 = vst [vmem:[%s2 + $0x80] sm:$0xff] %v974
  %1007 = vst [vmem:[%s2 + $0x88] sm:$0xff] %v975
  %1008 = vst [vmem:[%s2 + $0x90] sm:$0xff] %v976
  %1009 = vst [vmem:[%s2 + $0x98] sm:$0xff] %v977
  %1010 = vst [vmem:[%s2 + $0xa0] sm:$0xff] %v978
  %1011 = vst [vmem:[%s2 + $0xa8] sm:$0xff] %v979
  %1012 = vst [vmem:[%s2 + $0xb0] sm:$0xff] %v980
  %1013 = vst [vmem:[%s2 + $0xb8] sm:$0xff] %v981
  %1014 = vst [vmem:[%s2 + $0xc0] sm:$0xff] %v982
  %1015 = vst [vmem:[%s2 + $0xc8] sm:$0xff] %v983
  %1016 = vst [vmem:[%s2 + $0xd0] sm:$0xff] %v984
  %1017 = vst [vmem:[%s2 + $0xd8] sm:$0xff] %v985
  %1018 = vst [vmem:[%s2 + $0xe0] sm:$0xff] %v986
  %1019 = vst [vmem:[%s2 + $0xe8] sm:$0xff] %v987
  %1020 = vst [vmem:[%s2 + $0xf0] sm:$0xff] %v988
  %1021 = vst [vmem:[%s2 + $0xf8] sm:$0xff] %v989
  %1022 = vst [vmem:[%s2 + $0x100] sm:$0xff] %v687
  %1023 = vst [vmem:[%s2 + $0x108] sm:$0xff] %v688
  %1024 = vst [vmem:[%s2 + $0x110] sm:$0xff] %v689
  %1025 = vst [vmem:[%s2 + $0x118] sm:$0xff] %v690
  %1026 = vst [vmem:[%s2 + $0x120] sm:$0xff] %v691
  %1027 = vst [vmem:[%s2 + $0x128] sm:$0xff] %v692
  %1028 = vst [vmem:[%s2 + $0x130] sm:$0xff] %v693
  %1029 = vst [vmem:[%s2 + $0x138] sm:$0xff] %v694
  %1030 = vst [vmem:[%s2 + $0x140] sm:$0xff] %v695
  %1031 = vst [vmem:[%s2 + $0x148] sm:$0xff] %v696
  %1032 = vst [vmem:[%s2 + $0x150] sm:$0xff] %v697
  %1033 = vst [vmem:[%s2 + $0x158] sm:$0xff] %v698
  %1034 = vst [vmem:[%s2 + $0x160] sm:$0xff] %v699
  %1035 = vst [vmem:[%s2 + $0x168] sm:$0xff] %v700
  %1036 = vst [vmem:[%s2 + $0x170] sm:$0xff] %v701
  %1037 = vst [vmem:[%s2 + $0x178] sm:$0xff] %v702
  %1038 = vst [vmem:[%s2 + $0x180] sm:$0xff] %v380
  %1039 = vst [vmem:[%s2 + $0x188] sm:$0xff] %v381
  %1040 = vst [vmem:[%s2 + $0x190] sm:$0xff] %v382
  %1041 = vst [vmem:[%s2 + $0x198] sm:$0xff] %v383
  %1042 = vst [vmem:[%s2 + $0x1a0] sm:$0xff] %v384
  %1043 = vst [vmem:[%s2 + $0x1a8] sm:$0xff] %v385
  %1044 = vst [vmem:[%s2 + $0x1b0] sm:$0xff] %v386
  %1045 = vst [vmem:[%s2 + $0x1b8] sm:$0xff] %v387
  %1046 = vst [vmem:[%s2 + $0x1c0] sm:$0xff] %v116
  %1047 = vst [vmem:[%s2 + $0x1c8] sm:$0xff] %v117
  %1048 = vst [vmem:[%s2 + $0x1d0] sm:$0xff] %v118
  %1049 = vst [vmem:[%s2 + $0x1d8] sm:$0xff] %v119
  %1050 = vst [vmem:[%s2 + $0x1e0] sm:$0xff] %v120
  %1051 = vst [vmem:[%s2 + $0x1e8] sm:$0xff] %v121
  %1052 = vst [vmem:[%s2 + $0x1f0] sm:$0xff] %v122
  %1053 = vst [vmem:[%s2 + $0x1f8] sm:$0xff] %v123
  // Predicated region
  $region10: #{cond_skip_forward.1} parent=0 // pred_check
    _
  $region11: #{cond_skip_forward.1} parent=0 // pred_check_branch
    %1055 = sbr.rel (0) target = $region13
  $region12: #{cond_skip_forward.1} parent=0 // pred_region
    _
  $region13: #{cond_skip_forward.1} parent=0 // pred_fallthru
    _
  // Predicated region
  $region14: #{cond_skip_forward.1} parent=0 // pred_check
    _
  $region15: #{cond_skip_forward.1} parent=0 // pred_check_branch
    %1057 = sbr.rel (0) target = $region17
  $region16: #{cond_skip_forward.1} parent=0 // pred_region
    _
  $region17: #{cond_skip_forward.1} parent=0 // pred_fallthru
    _

</llo_original>
